<compile_context>
chip_gen: v6e
topology: v6e:2x2x1
jax: 0.10.0
libtpu: 0.0.40
codegen_flags: <defaults>
</compile_context>

<pallas_src>
import functools

import jax
import jax.numpy as jnp
from jax.experimental import pallas as pl
from jax.experimental.pallas import tpu as pltpu


def _max_encoder_kernel(x_ref, w1_ref, w2_ref, w3_ref, w4_ref,
                        bc_ref, bl_ref, o_ref, *,
                        B_blk, C_in, N, dim, C_out, compute_dtype):
    """One batch block: fused convs over all B_blk*N points + pooled MLP.

    x_ref : (B_blk, C_in, N)   input block (native NCW layout)
    w1_ref: (C_in, dim)        conv1 weight, stored (in, out)
    w2_ref: (dim, dim)         conv2 weight, stored (in, out)
    w3_ref: (dim, dim)         linear1 weight, PyTorch (out, in) layout
    w4_ref: (C_out, dim)       linear2 weight, PyTorch (out, in) layout
    bc_ref: (2, dim)           conv biases packed as rows      [b1; b2]
    bl_ref: (dmax, 2)          linear biases packed as columns [b3 | b4]
    o_ref : (C_out, B_blk)     output block, batch on lanes (lane-dense store)
    """
    P = B_blk * N

    # In-kernel cast: free VPU work under the DMA, no wrapper-side HBM pass.
    x = x_ref[...].astype(jnp.float32)                        # (B_blk, C_in, N)

    # Points-as-rows view: minor-dim transpose per batch element, then merge
    # the leading batch dim into the point axis.  Both 1x1 convs become ONE
    # fused matmul over the whole batch block (no per-b loop, no per-iteration
    # MXU drain).
    xp = jnp.transpose(x, (0, 2, 1)).reshape(P, C_in)         # (P, C_in)

    # conv1.  K = C_in is tiny (e.g. 4): a matmul would use only C_in/128 of
    # the MXU contraction depth, so do it as C_in rank-1 VPU accumulations and
    # reserve the MXU for the K=dim conv2 matmul (separate VLIW slots).
    if C_in <= 8:
        w1f = w1_ref[...].astype(jnp.float32)                 # (C_in, dim)
        h = xp[:, 0:1] * w1f[0:1, :]                          # (P, dim)
        for i in range(1, C_in):                              # static, tiny
            h = h + xp[:, i:i + 1] * w1f[i:i + 1, :]
    else:
        h = jnp.dot(xp.astype(compute_dtype), w1_ref[...],
                    preferred_element_type=jnp.float32)       # (P, dim)
    h = jnp.maximum(h + bc_ref[0:1, :], 0.0)                  # bias + ReLU (f32 VPU)

    # conv2: one fused MXU matmul for the whole batch block (K = dim).
    h = jnp.dot(h.astype(compute_dtype), w2_ref[...],
                preferred_element_type=jnp.float32) + bc_ref[1:2, :]   # (P, dim)

    # torch x.max(2)[0]: max over points.  Splitting the leading point axis is
    # layout-preserving (N is a sublane multiple); the reduce is a sublane max
    # per batch element.  Pooled features stay in registers (no scratch).
    pooled = jnp.max(h.reshape(B_blk, N, dim), axis=1)        # (B_blk, dim)

    # Post-pool MLP with batch on LANES so the final store is lane-dense
    # (C_out << 128 would otherwise be masked vst on every store).
    pooled_t = pooled.T                                       # (dim, B_blk)
    g = jnp.dot(w3_ref[...], pooled_t.astype(compute_dtype),
                preferred_element_type=jnp.float32) + bl_ref[:dim, 0:1]
    g = jnp.maximum(g, 0.0)                                   # (dim, B_blk)
    out = jnp.dot(w4_ref[...], g.astype(compute_dtype),
                  preferred_element_type=jnp.float32) + bl_ref[:C_out, 1:2]
    o_ref[...] = out.astype(o_ref.dtype)                      # one dense store


def max_encoder_forward(x_ncw, n_points, params, *,
                        compute_dtype=jnp.float32, batch_block=512):
    """Pallas forward of MaxEncoder.

    x_ncw: (B, C_in, N) float input in PyTorch NCW layout.
    n_points is accepted for API parity but unused (as in MaxEncoder.forward).
    compute_dtype: MXU operand dtype.  float32 default; jnp.bfloat16 on
    v6e/v7x roughly doubles MXU throughput (accumulation stays f32).
    """
    del n_points  # unused by MaxEncoder.forward (kept for API parity)
    w1, b1, w2, b2, w3, b3, w4, b4 = params
    B, C_in, N = x_ncw.shape
    dim = w1.shape[1]            # w1 stored (C_in, dim)
    C_out = w4.shape[0]          # w4 stored (C_out, dim)
    dmax = max(dim, C_out)

    # ---- batch blocking.  One grid step handles B_blk batch elements so the
    # conv matmuls see B_blk*N points at once.  No wrapper-side pad of x: the
    # grid uses cdiv and Pallas masks writes of the out-of-bounds tail block
    # (garbage rows only flow to discarded output columns).
    if B <= batch_block:
        B_blk = B                                   # single step, full-array blocks
    else:
        # Multiple of 128 keeps the (C_out, B_blk) output block lane-aligned
        # and lane-dense; >=2 grid steps lets the "parallel" batch axis shard
        # across both TensorCores on v7x.
        B_blk = max(128, (batch_block // 128) * 128)
        if B_blk >= B:
            B_blk = B
    grid = (pl.cdiv(B, B_blk),)

    # ---- weights/biases (tiny; casting/packing them here is negligible —
    # x itself is never touched in the wrapper).
    w1c = w1.astype(compute_dtype)                  # (C_in, dim)   conv1 (in, out)
    w2c = w2.astype(compute_dtype)                  # (dim, dim)    conv2 (in, out)
    w3c = w3.astype(compute_dtype)                  # (dim, dim)    lin1  (out, in)
    w4c = w4.astype(compute_dtype)                  # (C_out, dim)  lin2  (out, in)
    b_conv = jnp.stack([b1, b2], axis=0).astype(jnp.float32)            # (2, dim)
    b_lin = jnp.zeros((dmax, 2), jnp.float32)
    b_lin = b_lin.at[:dim, 0].set(b3).at[:C_out, 1].set(b4)             # (dmax, 2)

    kernel = functools.partial(
        _max_encoder_kernel, B_blk=B_blk, C_in=C_in, N=N, dim=dim,
        C_out=C_out, compute_dtype=compute_dtype)

    def full_spec(shape):
        nd = len(shape)
        return pl.BlockSpec(shape, lambda i, _nd=nd: (0,) * _nd)

    # VMEM footprint estimate (double-buffered x block + weights + f32
    # intermediates).  Demo sizes are KiB-scale; only override the scoped-VMEM
    # default (16 MiB v5e / 32 MiB v6e,v7x) when a large B_blk*N needs it, and
    # cap well under v7x's 64 MiB physical VMEM.
    itemsize = jnp.dtype(x_ncw.dtype).itemsize
    x_blk_bytes = B_blk * C_in * N * itemsize
    act_bytes = 3 * B_blk * N * max(dim, C_in) * 4
    w_bytes = 4 * (C_in * dim + 2 * dim * dim + C_out * dim + 2 * dim + 2 * dmax)
    est = 2 * x_blk_bytes + act_bytes + 2 * w_bytes + (1 << 20)
    vmem_limit = None if est <= 12 * 1024 * 1024 else min(2 * est, 96 * 1024 * 1024)

    out_t = pl.pallas_call(
        kernel,
        out_shape=jax.ShapeDtypeStruct((C_out, B), jnp.float32),
        grid_spec=pltpu.PrefetchScalarGridSpec(
            num_scalar_prefetch=0,
            grid=grid,
            in_specs=[
                pl.BlockSpec((B_blk, C_in, N), lambda i: (i, 0, 0)),    # x block (NCW)
                full_spec((C_in, dim)),                                 # conv1 W
                full_spec((dim, dim)),                                  # conv2 W
                full_spec((dim, dim)),                                  # lin1 W
                full_spec((C_out, dim)),                                # lin2 W
                full_spec((2, dim)),                                    # conv biases
                full_spec((dmax, 2)),                                   # linear biases
            ],
            out_specs=pl.BlockSpec((C_out, B_blk), lambda i: (0, i)),   # batch on lanes
        ),
        compiler_params=pltpu.CompilerParams(
            dimension_semantics=("parallel",),       # batch blocks independent
            vmem_limit_bytes=vmem_limit),
    )(x_ncw, w1c, w2c, w3c, w4c, b_conv, b_lin)

    y = out_t.T                                      # (B, C_out); tiny transpose
    # PyTorch returns (x, x.clone()); under JAX's functional model no device
    # copy is needed, so the same array is returned twice.
    return y, y


def init_params(key, input_channels, dim, output_channels):
    """Deterministic synthetic parameters (shapes follow the module __init__).

    Conv weights are stored transposed (in, out); Linear weights are stored in
    PyTorch (out, in) layout — exactly the orientations the kernel's fused
    matmuls consume, so no weight transposes are needed inside the kernel.
    """
    ks = jax.random.split(key, 8)

    def u(k, shape, fan_in):
        bound = 1.0 / jnp.sqrt(fan_in)
        return jax.random.uniform(k, shape, jnp.float32, -bound, bound)

    w1 = u(ks[0], (input_channels, dim), input_channels)    # conv1, (in, out)
    b1 = u(ks[1], (dim,), input_channels)
    w2 = u(ks[2], (dim, dim), dim)                          # conv2, (in, out)
    b2 = u(ks[3], (dim,), dim)
    w3 = u(ks[4], (dim, dim), dim)                          # linear1, (out, in)
    b3 = u(ks[5], (dim,), dim)
    w4 = u(ks[6], (output_channels, dim), dim)              # linear2, (out, in)
    b4 = u(ks[7], (output_channels,), dim)
    return (w1, b1, w2, b2, w3, b3, w4, b4)


def reference_forward(x_ncw, params):
    """Pure-JAX reference of the PyTorch forward (same parameter layouts)."""
    w1, b1, w2, b2, w3, b3, w4, b4 = params
    # Conv1d(k=1): y[b,o,n] = sum_i W[i,o] x[b,i,n] + b[o]   (w stored (in, out))
    h = jnp.einsum('io,bin->bon', w1, x_ncw) + b1[None, :, None]
    h = jnp.maximum(h, 0.0)
    h = jnp.einsum('io,bin->bon', w2, h) + b2[None, :, None]
    p = jnp.max(h, axis=2)                                   # (B, dim)
    g = jnp.maximum(p @ w3.T + b3, 0.0)                      # w3 is (out, in)
    return g @ w4.T + b4                                     # (B, C_out)


if __name__ == "__main__":
    B, C_in, N = 2, 4, 16
    dim, C_out = 32, 8

    key = jax.random.PRNGKey(0)
    k_x, k_p = jax.random.split(key)
    x = jax.random.normal(k_x, (B, C_in, N), jnp.float32)    # PyTorch NCW input
    n_points = jnp.full((B,), N, jnp.int32)                  # unused, API parity
    params = init_params(k_p, C_in, dim, C_out)

    y, y_clone = max_encoder_forward(x, n_points, params)
    y = jax.block_until_ready(y)
    y_clone = jax.block_until_ready(y_clone)

    y_ref = reference_forward(x, params)
    assert y.shape == (B, C_out) and y_clone.shape == (B, C_out)
    assert jnp.allclose(y, y_ref, atol=1e-4, rtol=1e-4)
    assert jnp.allclose(y_clone, y_ref, atol=1e-4, rtol=1e-4)

    print("KERNEL_OK")
</pallas_src>

<mosaic_0001>
module attributes {stable_mosaic.version = 11 : i64} {
  func.func @_max_encoder_kernel(%arg0: i32, %arg1: memref<2x4x16xf32, #tpu.memory_space<vmem>>, %arg2: memref<4x32xf32, #tpu.memory_space<vmem>>, %arg3: memref<32x32xf32, #tpu.memory_space<vmem>>, %arg4: memref<32x32xf32, #tpu.memory_space<vmem>>, %arg5: memref<8x32xf32, #tpu.memory_space<vmem>>, %arg6: memref<2x32xf32, #tpu.memory_space<vmem>>, %arg7: memref<32x2xf32, #tpu.memory_space<vmem>>, %arg8: memref<8x2xf32, #tpu.memory_space<vmem>>) attributes {dimension_semantics = [#tpu.dimension_semantics<parallel>], iteration_bounds = array<i64: 1>, scalar_prefetch = 0 : i64, scratch_operands = 0 : i64, tpu.core_type = #tpu.core_type<tc>, window_params = [{transform_indices = @transform_0, window_bounds = array<i64: 2, 4, 16>}, {pipeline_mode = #tpu.pipeline_mode<synchronous>, transform_indices = @transform_1, window_bounds = array<i64: 4, 32>}, {pipeline_mode = #tpu.pipeline_mode<synchronous>, transform_indices = @transform_2, window_bounds = array<i64: 32, 32>}, {pipeline_mode = #tpu.pipeline_mode<synchronous>, transform_indices = @transform_3, window_bounds = array<i64: 32, 32>}, {pipeline_mode = #tpu.pipeline_mode<synchronous>, transform_indices = @transform_4, window_bounds = array<i64: 8, 32>}, {pipeline_mode = #tpu.pipeline_mode<synchronous>, transform_indices = @transform_5, window_bounds = array<i64: 2, 32>}, {pipeline_mode = #tpu.pipeline_mode<synchronous>, transform_indices = @transform_6, window_bounds = array<i64: 32, 2>}, {transform_indices = @transform_7, window_bounds = array<i64: 8, 2>}]} {
    %c0 = arith.constant 0 : index
    %c0_0 = arith.constant 0 : index
    %c0_1 = arith.constant 0 : index
    %0 = vector.load %arg1[%c0, %c0_0, %c0_1] : memref<2x4x16xf32, #tpu.memory_space<vmem>>, vector<2x4x16xf32>
    %1 = tpu.transpose %0, [0, 2, 1] : vector<2x4x16xf32> -> vector<2x16x4xf32>
    %2 = vector.shape_cast %1 : vector<2x16x4xf32> to vector<32x4xf32>
    %c0_2 = arith.constant 0 : index
    %c0_3 = arith.constant 0 : index
    %3 = vector.load %arg2[%c0_2, %c0_3] : memref<4x32xf32, #tpu.memory_space<vmem>>, vector<4x32xf32>
    %4 = vector.extract_strided_slice %2 {offsets = [0, 0], sizes = [32, 1], strides = [1, 1]} : vector<32x4xf32> to vector<32x1xf32>
    %5 = vector.extract_strided_slice %3 {offsets = [0, 0], sizes = [1, 32], strides = [1, 1]} : vector<4x32xf32> to vector<1x32xf32>
    %6 = vector.broadcast %4 : vector<32x1xf32> to vector<32x32xf32>
    %7 = vector.broadcast %5 : vector<1x32xf32> to vector<32x32xf32>
    %8 = arith.mulf %6, %7 : vector<32x32xf32>
    %9 = vector.extract_strided_slice %2 {offsets = [0, 1], sizes = [32, 1], strides = [1, 1]} : vector<32x4xf32> to vector<32x1xf32>
    %10 = vector.extract_strided_slice %3 {offsets = [1, 0], sizes = [1, 32], strides = [1, 1]} : vector<4x32xf32> to vector<1x32xf32>
    %11 = vector.broadcast %9 : vector<32x1xf32> to vector<32x32xf32>
    %12 = vector.broadcast %10 : vector<1x32xf32> to vector<32x32xf32>
    %13 = arith.mulf %11, %12 : vector<32x32xf32>
    %14 = arith.addf %8, %13 : vector<32x32xf32>
    %15 = vector.extract_strided_slice %2 {offsets = [0, 2], sizes = [32, 1], strides = [1, 1]} : vector<32x4xf32> to vector<32x1xf32>
    %16 = vector.extract_strided_slice %3 {offsets = [2, 0], sizes = [1, 32], strides = [1, 1]} : vector<4x32xf32> to vector<1x32xf32>
    %17 = vector.broadcast %15 : vector<32x1xf32> to vector<32x32xf32>
    %18 = vector.broadcast %16 : vector<1x32xf32> to vector<32x32xf32>
    %19 = arith.mulf %17, %18 : vector<32x32xf32>
    %20 = arith.addf %14, %19 : vector<32x32xf32>
    %21 = vector.extract_strided_slice %2 {offsets = [0, 3], sizes = [32, 1], strides = [1, 1]} : vector<32x4xf32> to vector<32x1xf32>
    %22 = vector.extract_strided_slice %3 {offsets = [3, 0], sizes = [1, 32], strides = [1, 1]} : vector<4x32xf32> to vector<1x32xf32>
    %23 = vector.broadcast %21 : vector<32x1xf32> to vector<32x32xf32>
    %24 = vector.broadcast %22 : vector<1x32xf32> to vector<32x32xf32>
    %25 = arith.mulf %23, %24 : vector<32x32xf32>
    %26 = arith.addf %20, %25 : vector<32x32xf32>
    %c0_4 = arith.constant 0 : index
    %c0_5 = arith.constant 0 : index
    %27 = vector.load %arg6[%c0_4, %c0_5] : memref<2x32xf32, #tpu.memory_space<vmem>>, vector<1x32xf32>
    %28 = vector.broadcast %27 : vector<1x32xf32> to vector<32x32xf32>
    %29 = arith.addf %26, %28 : vector<32x32xf32>
    %cst = arith.constant 0.000000e+00 : f32
    %30 = vector.broadcast %cst : f32 to vector<32x32xf32>
    %31 = arith.maximumf %29, %30 : vector<32x32xf32>
    %c0_6 = arith.constant 0 : index
    %c0_7 = arith.constant 0 : index
    %32 = vector.load %arg3[%c0_6, %c0_7] : memref<32x32xf32, #tpu.memory_space<vmem>>, vector<32x32xf32>
    %cst_8 = arith.constant dense<0.000000e+00> : vector<32x32xf32>
    %33 = tpu.matmul %31, %32, %cst_8 {dimension_numbers = #tpu.dot_dimension_numbers<[1], [0], [0], [1], [0, 0, 1, 1], [], []>} : vector<32x32xf32>, vector<32x32xf32>, vector<32x32xf32> -> vector<32x32xf32>
    %c1 = arith.constant 1 : index
    %c0_9 = arith.constant 0 : index
    %34 = vector.load %arg6[%c1, %c0_9] : memref<2x32xf32, #tpu.memory_space<vmem>>, vector<1x32xf32>
    %35 = vector.broadcast %34 : vector<1x32xf32> to vector<32x32xf32>
    %36 = arith.addf %33, %35 : vector<32x32xf32>
    %37 = vector.shape_cast %36 : vector<32x32xf32> to vector<2x16x32xf32>
    %cst_10 = arith.constant dense<0xFF800000> : vector<2x32xf32>
    %38 = vector.multi_reduction <maximumf>, %37, %cst_10 [1] : vector<2x16x32xf32> to vector<2x32xf32>
    %39 = tpu.transpose %38, [1, 0] : vector<2x32xf32> -> vector<32x2xf32>
    %c0_11 = arith.constant 0 : index
    %c0_12 = arith.constant 0 : index
    %40 = vector.load %arg4[%c0_11, %c0_12] : memref<32x32xf32, #tpu.memory_space<vmem>>, vector<32x32xf32>
    %cst_13 = arith.constant dense<0.000000e+00> : vector<32x2xf32>
    %41 = tpu.matmul %40, %39, %cst_13 {dimension_numbers = #tpu.dot_dimension_numbers<[1], [0], [0], [1], [0, 0, 1, 1], [], []>} : vector<32x32xf32>, vector<32x2xf32>, vector<32x2xf32> -> vector<32x2xf32>
    %c0_14 = arith.constant 0 : index
    %c0_15 = arith.constant 0 : index
    %42 = vector.load %arg7[%c0_14, %c0_15] : memref<32x2xf32, #tpu.memory_space<vmem>>, vector<32x1xf32>
    %43 = vector.broadcast %42 : vector<32x1xf32> to vector<32x2xf32>
    %44 = arith.addf %41, %43 : vector<32x2xf32>
    %cst_16 = arith.constant 0.000000e+00 : f32
    %45 = vector.broadcast %cst_16 : f32 to vector<32x2xf32>
    %46 = arith.maximumf %44, %45 : vector<32x2xf32>
    %c0_17 = arith.constant 0 : index
    %c0_18 = arith.constant 0 : index
    %47 = vector.load %arg5[%c0_17, %c0_18] : memref<8x32xf32, #tpu.memory_space<vmem>>, vector<8x32xf32>
    %cst_19 = arith.constant dense<0.000000e+00> : vector<8x2xf32>
    %48 = tpu.matmul %47, %46, %cst_19 {dimension_numbers = #tpu.dot_dimension_numbers<[1], [0], [0], [1], [0, 0, 1, 1], [], []>} : vector<8x32xf32>, vector<32x2xf32>, vector<8x2xf32> -> vector<8x2xf32>
    %c0_20 = arith.constant 0 : index
    %c1_21 = arith.constant 1 : index
    %49 = vector.load %arg7[%c0_20, %c1_21] : memref<32x2xf32, #tpu.memory_space<vmem>>, vector<8x1xf32>
    %50 = vector.broadcast %49 : vector<8x1xf32> to vector<8x2xf32>
    %51 = arith.addf %48, %50 : vector<8x2xf32>
    %c0_22 = arith.constant 0 : index
    %c0_23 = arith.constant 0 : index
    %52 = vector.load %arg8[%c0_22, %c0_23] : memref<8x2xf32, #tpu.memory_space<vmem>>, vector<8x2xf32>
    tpu.vector_store %arg8[%c0_22, %c0_23], %51 {strides = array<i32>} : memref<8x2xf32, #tpu.memory_space<vmem>>, vector<8x2xf32>,
    return
  }
  func.func @transform_0(%arg0: i32) -> (i32, i32, i32) {
    %c0_i32 = arith.constant 0 : i32
    %c0_i32_0 = arith.constant 0 : i32
    %c0_i32_1 = arith.constant 0 : i32
    return %arg0, %c0_i32, %c0_i32_0 : i32, i32, i32
  }
  func.func @transform_1(%arg0: i32) -> (i32, i32) {
    %c0_i32 = arith.constant 0 : i32
    %c0_i32_0 = arith.constant 0 : i32
    %c0_i32_1 = arith.constant 0 : i32
    return %c0_i32, %c0_i32_0 : i32, i32
  }
  func.func @transform_2(%arg0: i32) -> (i32, i32) {
    %c0_i32 = arith.constant 0 : i32
    %c0_i32_0 = arith.constant 0 : i32
    %c0_i32_1 = arith.constant 0 : i32
    return %c0_i32, %c0_i32_0 : i32, i32
  }
  func.func @transform_3(%arg0: i32) -> (i32, i32) {
    %c0_i32 = arith.constant 0 : i32
    %c0_i32_0 = arith.constant 0 : i32
    %c0_i32_1 = arith.constant 0 : i32
    return %c0_i32, %c0_i32_0 : i32, i32
  }
  func.func @transform_4(%arg0: i32) -> (i32, i32) {
    %c0_i32 = arith.constant 0 : i32
    %c0_i32_0 = arith.constant 0 : i32
    %c0_i32_1 = arith.constant 0 : i32
    return %c0_i32, %c0_i32_0 : i32, i32
  }
  func.func @transform_5(%arg0: i32) -> (i32, i32) {
    %c0_i32 = arith.constant 0 : i32
    %c0_i32_0 = arith.constant 0 : i32
    %c0_i32_1 = arith.constant 0 : i32
    return %c0_i32, %c0_i32_0 : i32, i32
  }
  func.func @transform_6(%arg0: i32) -> (i32, i32) {
    %c0_i32 = arith.constant 0 : i32
    %c0_i32_0 = arith.constant 0 : i32
    %c0_i32_1 = arith.constant 0 : i32
    return %c0_i32, %c0_i32_0 : i32, i32
  }
  func.func @transform_7(%arg0: i32) -> (i32, i32) {
    %c0_i32 = arith.constant 0 : i32
    %c0_i32_0 = arith.constant 0 : i32
    return %c0_i32, %arg0 : i32, i32
  }
}

</mosaic_0001>

<llo_original>
// kernel: tpu_custom_call.1
$region0: #{tpu_custom_call.1}
  #allocation0 [shape = 'u32[]', space=smem, size = 0x4, offset = 0x4, fixed_abs, tag = 'smem constant byte address 0x4 - core index']
  #allocation1 [shape = 'u32[144,128]{1,0:T(1,128)}', space=vmem, size = 0x12000, scoped, tag = 'internal scratch']
  %s0 = inlined_call_operand.hbm [shape: f32[2,4,16], index: 0, kind: input, shape index: {}]
  %s1 = inlined_call_operand.hbm [shape: f32[4,32], index: 1, kind: input, shape index: {}]
  %s2 = inlined_call_operand.vmem [shape: f32[32,32], index: 2, kind: input, shape index: {}]
  %s3 = inlined_call_operand.hbm [shape: f32[32,32], index: 3, kind: input, shape index: {}]
  %s4 = inlined_call_operand.vmem [shape: f32[8,32], index: 4, kind: input, shape index: {}]
  %s5 = inlined_call_operand.hbm [shape: f32[2,32], index: 5, kind: input, shape index: {}]
  %s6 = inlined_call_operand.vmem [shape: f32[32,2], index: 6, kind: input, shape index: {}]
  %s7 = inlined_call_operand.vmem [shape: f32[8,2], index: 7, kind: output, shape index: {}]
  %s8 = sld [smem:[#allocation0]]
  $region54: #{tpu_custom_call.1} parent=0
    _
  %s10 = ssub.s32 1, %s8
  %s11 = scalar_select 0, %s10, %s8
  $region1: #{tpu_custom_call.1} parent=0
    #allocation2 [shape = 'u8[4096]{0}', space=vmem, size = 0x1000, scoped, tag = 'input window, operand 0, single buffered']
    #allocation3 [shape = 's32[1]{0}', space=sflag, size = 0x4, scoped, tag = 'scoped memory for tpu_custom_call.1']
    #allocation4 [shape = 'u8[2048]{0}', space=vmem, size = 0x800, scoped, tag = 'input window, operand 1, single buffered']
    #allocation5 [shape = 's32[1]{0}', space=sflag, size = 0x4, scoped, tag = 'scoped memory for tpu_custom_call.1']
    #allocation6 [shape = 'u8[16384]{0}', space=vmem, size = 0x4000, scoped, tag = 'input window, operand 3, single buffered']
    #allocation7 [shape = 'u8[1024]{0}', space=vmem, size = 0x400, scoped, tag = 'input window, operand 5, single buffered']
    #allocation8 [shape = 's32[1]{0}', space=sflag, size = 0x4, scoped, tag = 'scoped memory for tpu_custom_call.1']
    %12 = vsyncpa [#allocation3], 0
    %13 = vsyncpa [#allocation5], 0
    %14 = vsyncpa [#allocation8], 0
    // Predicated region
    $region2: #{tpu_custom_call.1} parent=1 // pred_check
      _
    $region3: #{tpu_custom_call.1} parent=1 // pred_check_branch
      %16 = sbr.rel (0) target = $region5
    $region4: #{tpu_custom_call.1} parent=1 // pred_region
      %s18 = ssub.s32 128, 128
      %19 = vsyncadd [#allocation3], %s18
      %s20 = sshll.u32 [#allocation2], 4
      %s21 = int_to_ptr.vmem [resolvable:$true] %s20
      %26 = dma.hbm_to_vmem [thread:$0]  %s0, 128, %s21, [#allocation3], 64, 64, 4
    $region5: #{tpu_custom_call.1} parent=1 // pred_fallthru
      _
    // Predicated region
    $region6: #{tpu_custom_call.1} parent=1 // pred_check
      _
    $region7: #{tpu_custom_call.1} parent=1 // pred_check_branch
      %28 = sbr.rel (0) target = $region9
    $region8: #{tpu_custom_call.1} parent=1 // pred_region
      %s30 = ssub.s32 64, 64
      %31 = vsyncadd [#allocation5], %s30
      %s33 = sshll.u32 [#allocation4], 4
      %s34 = int_to_ptr.vmem [resolvable:$true] %s33
      %36 = dma.hbm_to_vmem [thread:$0]  %s1, 64, %s34, [#allocation5]
    $region9: #{tpu_custom_call.1} parent=1 // pred_fallthru
      _
    // Predicated region
    $region10: #{tpu_custom_call.1} parent=1 // pred_check
      _
    $region11: #{tpu_custom_call.1} parent=1 // pred_check_branch
      %38 = sbr.rel (0) target = $region13
    $region12: #{tpu_custom_call.1} parent=1 // pred_region
      _
    $region13: #{tpu_custom_call.1} parent=1 // pred_fallthru
      _
    // Predicated region
    $region14: #{tpu_custom_call.1} parent=1 // pred_check
      _
    $region15: #{tpu_custom_call.1} parent=1 // pred_check_branch
      %40 = sbr.rel (0) target = $region17
    $region16: #{tpu_custom_call.1} parent=1 // pred_region
      %s42 = ssub.s32 512, 512
      %43 = vsyncadd [#allocation5], %s42
      %s44 = sshll.u32 [#allocation6], 4
      %s45 = int_to_ptr.vmem [resolvable:$true] %s44
      %50 = dma.hbm_to_vmem [thread:$0]  %s3, 512, %s45, [#allocation5], 128, 128, 8
    $region17: #{tpu_custom_call.1} parent=1 // pred_fallthru
      _
    // Predicated region
    $region18: #{tpu_custom_call.1} parent=1 // pred_check
      _
    $region19: #{tpu_custom_call.1} parent=1 // pred_check_branch
      %52 = sbr.rel (0) target = $region21
    $region20: #{tpu_custom_call.1} parent=1 // pred_region
      _
    $region21: #{tpu_custom_call.1} parent=1 // pred_fallthru
      _
    // Predicated region
    $region22: #{tpu_custom_call.1} parent=1 // pred_check
      _
    $region23: #{tpu_custom_call.1} parent=1 // pred_check_branch
      %54 = sbr.rel (0) target = $region25
    $region24: #{tpu_custom_call.1} parent=1 // pred_region
      %s56 = ssub.s32 32, 32
      %57 = vsyncadd [#allocation8], %s56
      %s59 = sshll.u32 [#allocation7], 4
      %s60 = int_to_ptr.vmem [resolvable:$true] %s59
      %62 = dma.hbm_to_vmem [thread:$0]  %s5, 32, %s60, [#allocation8]
    $region25: #{tpu_custom_call.1} parent=1 // pred_fallthru
      _
    // Predicated region
    $region26: #{tpu_custom_call.1} parent=1 // pred_check
      _
    $region27: #{tpu_custom_call.1} parent=1 // pred_check_branch
      %64 = sbr.rel (0) target = $region29
    $region28: #{tpu_custom_call.1} parent=1 // pred_region
      _
    $region29: #{tpu_custom_call.1} parent=1 // pred_fallthru
      _
    // Predicated region
    $region30: #{tpu_custom_call.1} parent=1 // pred_check
      _
    $region31: #{tpu_custom_call.1} parent=1 // pred_check_branch
      %66 = sbr.rel (0) target = $region33
    $region32: #{tpu_custom_call.1} parent=1 // pred_region
      %67 = dma.done [#allocation3], 128
    $region33: #{tpu_custom_call.1} parent=1 // pred_fallthru
      _
    // Predicated region
    $region34: #{tpu_custom_call.1} parent=1 // pred_check
      _
    $region35: #{tpu_custom_call.1} parent=1 // pred_check_branch
      %69 = sbr.rel (0) target = $region37
    $region36: #{tpu_custom_call.1} parent=1 // pred_region
      %70 = dma.done [#allocation5], 64
    $region37: #{tpu_custom_call.1} parent=1 // pred_fallthru
      _
    // Predicated region
    $region38: #{tpu_custom_call.1} parent=1 // pred_check
      _
    $region39: #{tpu_custom_call.1} parent=1 // pred_check_branch
      %72 = sbr.rel (0) target = $region41
    $region40: #{tpu_custom_call.1} parent=1 // pred_region
      %73 = dma.done [#allocation5], 512
    $region41: #{tpu_custom_call.1} parent=1 // pred_fallthru
      _
    // Predicated region
    $region42: #{tpu_custom_call.1} parent=1 // pred_check
      _
    $region43: #{tpu_custom_call.1} parent=1 // pred_check_branch
      %75 = sbr.rel (0) target = $region45
    $region44: #{tpu_custom_call.1} parent=1 // pred_region
      %76 = dma.done [#allocation8], 32
    $region45: #{tpu_custom_call.1} parent=1 // pred_fallthru
      _
    %v77 = vld [vmem:[#allocation2] sm:$0xf]
    %v78 = vld [vmem:[#allocation2 + $0x4] sm:$0xf]
    %79 = vxpose.xlu0.b32.start [1/16] %v77, 128
    %80 = vxpose.xlu0.b32.cont [2/16] 0.0, 128
    %81 = vxpose.xlu0.b32.cont [3/16] 0.0, 128
    %82 = vxpose.xlu0.b32.cont [4/16] 0.0, 128
    %83 = vxpose.xlu0.b32.cont [5/16] 0.0, 128
    %84 = vxpose.xlu0.b32.cont [6/16] 0.0, 128
    %85 = vxpose.xlu0.b32.cont [7/16] 0.0, 128
    %86 = vxpose.xlu0.b32.cont [8/16] 0.0, 128
    %87 = vxpose.xlu0.b32.cont [9/16] 0.0, 128
    %88 = vxpose.xlu0.b32.cont [10/16] 0.0, 128
    %89 = vxpose.xlu0.b32.cont [11/16] 0.0, 128
    %90 = vxpose.xlu0.b32.cont [12/16] 0.0, 128
    %91 = vxpose.xlu0.b32.cont [13/16] 0.0, 128
    %92 = vxpose.xlu0.b32.cont [14/16] 0.0, 128
    %93 = vxpose.xlu0.b32.cont [15/16] 0.0, 128
    %94 = vxpose.xlu0.b32.end [16/16] 0.0, 128
    %v95 = vpop.trf.xlu0
    %v96 = vpop.trf.xlu0
    %v97 = vpop.trf.xlu0
    %v98 = vpop.trf.xlu0
    %v99 = vpop.trf.xlu0
    %v100 = vpop.trf.xlu0
    %v101 = vpop.trf.xlu0
    %v102 = vpop.trf.xlu0
    %v103 = vpop.trf.xlu0
    %v104 = vpop.trf.xlu0
    %v105 = vpop.trf.xlu0
    %v106 = vpop.trf.xlu0
    %v107 = vpop.trf.xlu0
    %v108 = vpop.trf.xlu0
    %v109 = vpop.trf.xlu0
    %v110 = vpop.trf.xlu0
    %111 = vxpose.xlu0.b32.start [1/16] %v78, 128
    %112 = vxpose.xlu0.b32.cont [2/16] 0.0, 128
    %113 = vxpose.xlu0.b32.cont [3/16] 0.0, 128
    %114 = vxpose.xlu0.b32.cont [4/16] 0.0, 128
    %115 = vxpose.xlu0.b32.cont [5/16] 0.0, 128
    %116 = vxpose.xlu0.b32.cont [6/16] 0.0, 128
    %117 = vxpose.xlu0.b32.cont [7/16] 0.0, 128
    %118 = vxpose.xlu0.b32.cont [8/16] 0.0, 128
    %119 = vxpose.xlu0.b32.cont [9/16] 0.0, 128
    %120 = vxpose.xlu0.b32.cont [10/16] 0.0, 128
    %121 = vxpose.xlu0.b32.cont [11/16] 0.0, 128
    %122 = vxpose.xlu0.b32.cont [12/16] 0.0, 128
    %123 = vxpose.xlu0.b32.cont [13/16] 0.0, 128
    %124 = vxpose.xlu0.b32.cont [14/16] 0.0, 128
    %125 = vxpose.xlu0.b32.cont [15/16] 0.0, 128
    %126 = vxpose.xlu0.b32.end [16/16] 0.0, 128
    %v127 = vpop.trf.xlu0
    %v128 = vpop.trf.xlu0
    %v129 = vpop.trf.xlu0
    %v130 = vpop.trf.xlu0
    %v131 = vpop.trf.xlu0
    %v132 = vpop.trf.xlu0
    %v133 = vpop.trf.xlu0
    %v134 = vpop.trf.xlu0
    %v135 = vpop.trf.xlu0
    %v136 = vpop.trf.xlu0
    %v137 = vpop.trf.xlu0
    %v138 = vpop.trf.xlu0
    %v139 = vpop.trf.xlu0
    %v140 = vpop.trf.xlu0
    %v141 = vpop.trf.xlu0
    %v142 = vpop.trf.xlu0
    %v143 = vld [vmem:[#allocation4] sm:$0xf]
    %145 = vset.pattern.permute.xlu0 0
    %146 = vperm.xlu0 %145, %v95
    %v147 = vpop.permute.xlu0 %146
    %150 = vset.pattern.permute.xlu0 0
    %151 = vperm.xlu0 %150, %v96
    %v152 = vpop.permute.xlu0 %151
    %155 = vset.pattern.permute.xlu0 0
    %156 = vperm.xlu0 %155, %v127
    %v157 = vpop.permute.xlu0 %156
    %160 = vset.pattern.permute.xlu0 0
    %161 = vperm.xlu0 %160, %v128
    %v162 = vpop.permute.xlu0 %161
    %v164 = vlaneseq
    %v165 = vshrl.u32 %v164, 7
    %v166 = vsub.s32 0, %v165
    %v167 = vrot.slane %v143, %v166
    %v168 = vmul.f32 %v147, %v167
    %v169 = vmul.f32 %v152, %v167
    %v170 = vmul.f32 %v157, %v167
    %v171 = vmul.f32 %v162, %v167
    %172 = vset.pattern.permute.xlu0 1
    %173 = vperm.xlu0 %172, %v95
    %v174 = vpop.permute.xlu0 %173
    %176 = vset.pattern.permute.xlu0 1
    %177 = vperm.xlu0 %176, %v96
    %v178 = vpop.permute.xlu0 %177
    %180 = vset.pattern.permute.xlu0 1
    %181 = vperm.xlu0 %180, %v127
    %v182 = vpop.permute.xlu0 %181
    %184 = vset.pattern.permute.xlu0 1
    %185 = vperm.xlu0 %184, %v128
    %v186 = vpop.permute.xlu0 %185
    %v188 = vlaneseq
    %v189 = vshrl.u32 %v188, 7
    %v190 = vsub.s32 1, %v189
    %v191 = vrot.slane %v143, %v190
    %v192 = vmul.f32 %v174, %v191
    %v193 = vmul.f32 %v178, %v191
    %v194 = vmul.f32 %v182, %v191
    %v195 = vmul.f32 %v186, %v191
    %v196 = vadd.f32 %v168, %v192
    %v197 = vadd.f32 %v169, %v193
    %v198 = vadd.f32 %v170, %v194
    %v199 = vadd.f32 %v171, %v195
    %200 = vset.pattern.permute.xlu0 2
    %201 = vperm.xlu0 %200, %v95
    %v202 = vpop.permute.xlu0 %201
    %204 = vset.pattern.permute.xlu0 2
    %205 = vperm.xlu0 %204, %v96
    %v206 = vpop.permute.xlu0 %205
    %208 = vset.pattern.permute.xlu0 2
    %209 = vperm.xlu0 %208, %v127
    %v210 = vpop.permute.xlu0 %209
    %212 = vset.pattern.permute.xlu0 2
    %213 = vperm.xlu0 %212, %v128
    %v214 = vpop.permute.xlu0 %213
    %v216 = vlaneseq
    %v217 = vshrl.u32 %v216, 7
    %v218 = vsub.s32 2, %v217
    %v219 = vrot.slane %v143, %v218
    %v220 = vmul.f32 %v202, %v219
    %v221 = vmul.f32 %v206, %v219
    %v222 = vmul.f32 %v210, %v219
    %v223 = vmul.f32 %v214, %v219
    %v224 = vadd.f32 %v196, %v220
    %v225 = vadd.f32 %v197, %v221
    %v226 = vadd.f32 %v198, %v222
    %v227 = vadd.f32 %v199, %v223
    %228 = vset.pattern.permute.xlu0 3
    %229 = vperm.xlu0 %228, %v95
    %v230 = vpop.permute.xlu0 %229
    %232 = vset.pattern.permute.xlu0 3
    %233 = vperm.xlu0 %232, %v96
    %v234 = vpop.permute.xlu0 %233
    %236 = vset.pattern.permute.xlu0 3
    %237 = vperm.xlu0 %236, %v127
    %v238 = vpop.permute.xlu0 %237
    %240 = vset.pattern.permute.xlu0 3
    %241 = vperm.xlu0 %240, %v128
    %v242 = vpop.permute.xlu0 %241
    %v244 = vlaneseq
    %v245 = vshrl.u32 %v244, 7
    %v246 = vsub.s32 3, %v245
    %v247 = vrot.slane %v143, %v246
    %v248 = vmul.f32 %v230, %v247
    %v249 = vmul.f32 %v234, %v247
    %v250 = vmul.f32 %v238, %v247
    %v251 = vmul.f32 %v242, %v247
    %v252 = vadd.f32 %v224, %v248
    %v253 = vadd.f32 %v225, %v249
    %v254 = vadd.f32 %v226, %v250
    %v255 = vadd.f32 %v227, %v251
    %v256 = vld [vmem:[#allocation7] sm:$0x1]
    %v257 = vlaneseq
    %v258 = vshrl.u32 %v257, 7
    %v259 = vsub.s32 0, %v258
    %v260 = vrot.slane %v256, %v259
    %v261 = vadd.f32 %v252, %v260
    %v262 = vadd.f32 %v253, %v260
    %v263 = vadd.f32 %v254, %v260
    %v264 = vadd.f32 %v255, %v260
    %v265 = vmax.f32 %v261, 0.0
    %v266 = vmax.f32 %v262, 0.0
    %v267 = vmax.f32 %v263, 0.0
    %v268 = vmax.f32 %v264, 0.0
    %v269 = vld [vmem:[%s2] sm:$0xff]
    %v270 = vld [vmem:[%s2 + $0x8] sm:$0xff]
    %v271 = vld [vmem:[%s2 + $0x10] sm:$0xff]
    %v272 = vld [vmem:[%s2 + $0x18] sm:$0xff]
    %v273 = vld [vmem:[#allocation7 + $0x1] sm:$0x1]
    %v274 = vlaneseq
    %v275 = vshrl.u32 %v274, 7
    %v276 = vsub.s32 0, %v275
    %v277 = vrot.slane %v273, %v276
    %vm278 = vcmask 261120
    %v280 = vsel %vm278, %v265, 0
    %v283 = vsel %vm278, %v266, 0
    %v286 = vsel %vm278, %v267, 0
    %v289 = vsel %vm278, %v268, 0
    %291 = vmatprep.subr.mxu0 0.0
    %292 = vmatpush1.msra.mxu0 0.0
    %293 = vmatprep.subr.mxu0 0.0
    %294 = vmatpush1.msra.mxu0 0.0
    %295 = vmatprep.subr.mxu0 0.0
    %296 = vmatpush1.msra.mxu0 0.0
    %297 = vmatprep.subr.mxu0 0.0
    %298 = vmatpush1.msra.mxu0 0.0
    %299 = vmatprep.subr.mxu0 0.0
    %300 = vmatpush1.msra.mxu0 0.0
    %301 = vmatprep.subr.mxu0 0.0
    %302 = vmatpush1.msra.mxu0 0.0
    %303 = vmatprep.subr.mxu0 0.0
    %304 = vmatpush1.msra.mxu0 0.0
    %305 = vmatprep.subr.mxu0 0.0
    %306 = vmatpush1.msra.mxu0 0.0
    %307 = vmatprep.subr.mxu0 0.0
    %308 = vmatpush1.msra.mxu0 0.0
    %309 = vmatprep.subr.mxu0 0.0
    %310 = vmatpush1.msra.mxu0 0.0
    %311 = vmatprep.subr.mxu0 0.0
    %312 = vmatpush1.msra.mxu0 0.0
    %313 = vmatprep.subr.mxu0 0.0
    %314 = vmatpush1.msra.mxu0 0.0
    %315 = vmatprep.subr.mxu0 0.0
    %316 = vmatpush1.msra.mxu0 %v272
    %317 = vmatprep.subr.mxu0 0.0
    %318 = vmatpush1.msra.mxu0 %v271
    %319 = vmatprep.subr.mxu0 0.0
    %320 = vmatpush1.msra.mxu0 %v270
    %321 = vmatprep.subr.mxu0 0.0
    %322 = vmatpush1.msra.mxu0 %v269
    %323 = vmatprep.subr.mxu0 0.0
    %324 = vmatpush2.msra.mxu0 0.0
    %325 = vmatprep.subr.mxu0 0.0
    %326 = vmatpush2.msra.mxu0 0.0
    %327 = vmatprep.subr.mxu0 0.0
    %328 = vmatpush2.msra.mxu0 0.0
    %329 = vmatprep.subr.mxu0 0.0
    %330 = vmatpush2.msra.mxu0 0.0
    %331 = vmatprep.subr.mxu0 0.0
    %332 = vmatpush2.msra.mxu0 0.0
    %333 = vmatprep.subr.mxu0 0.0
    %334 = vmatpush2.msra.mxu0 0.0
    %335 = vmatprep.subr.mxu0 0.0
    %336 = vmatpush2.msra.mxu0 0.0
    %337 = vmatprep.subr.mxu0 0.0
    %338 = vmatpush2.msra.mxu0 0.0
    %339 = vmatprep.subr.mxu0 0.0
    %340 = vmatpush2.msra.mxu0 0.0
    %341 = vmatprep.subr.mxu0 0.0
    %342 = vmatpush2.msra.mxu0 0.0
    %343 = vmatprep.subr.mxu0 0.0
    %344 = vmatpush2.msra.mxu0 0.0
    %345 = vmatprep.subr.mxu0 0.0
    %346 = vmatpush2.msra.mxu0 0.0
    %347 = vmatprep.subr.mxu0 0.0
    %348 = vmatpush2.msra.mxu0 0.0
    %349 = vmatprep.subr.mxu0 0.0
    %350 = vmatpush2.msra.mxu0 0.0
    %351 = vmatprep.subr.mxu0 0.0
    %352 = vmatpush2.msra.mxu0 0.0
    %353 = vmatprep.subr.mxu0 0.0
    %354 = vmatpush2.msra.mxu0 0.0
    %355 = vmatprep.mubr.f32.mxu0 0.0
    %356 = vmatmul.mubr.f32.gmra.mxu0 %v280
    %v357 = vpop.f32.mrf.mxu0
    %v358 = vadd.f32 %v277, %v357
    %v359 = vpop.f32.mrf.mxu0
    %360 = vmatprep.mubr.f32.mxu0 0.0
    %361 = vmatmul.mubr.f32.gmra.mxu0 %v283
    %v362 = vpop.f32.mrf.mxu0
    %v363 = vadd.f32 %v277, %v362
    %v364 = vpop.f32.mrf.mxu0
    %365 = vmatprep.mubr.f32.mxu0 0.0
    %366 = vmatmul.mubr.f32.gmra.mxu0 %v286
    %v367 = vpop.f32.mrf.mxu0
    %v368 = vadd.f32 %v277, %v367
    %v369 = vpop.f32.mrf.mxu0
    %370 = vmatprep.mubr.f32.mxu0 0.0
    %371 = vmatmul.mubr.f32.gmra.mxu0 %v289
    %v372 = vpop.f32.mrf.mxu0
    %v373 = vadd.f32 %v277, %v372
    %v374 = vpop.f32.mrf.mxu0
    %375 = vdwg.mxu0
    %v376 = vsel %vm278, %v358, -inf
    %v377 = vsel %vm278, %v363, -inf
    %v378 = vmax.f32 %v376, %v377
    %v379 = vrot.slane %v378, 4
    %v380 = vmax.f32 %v378, %v379
    %v381 = vrot.slane %v380, 2
    %v382 = vmax.f32 %v380, %v381
    %v383 = vrot.slane %v382, 1
    %v384 = vmax.f32 %v382, %v383
    %v385 = vsel %vm278, %v368, -inf
    %v386 = vsel %vm278, %v373, -inf
    %v387 = vmax.f32 %v385, %v386
    %v388 = vrot.slane %v387, 4
    %v389 = vmax.f32 %v387, %v388
    %v390 = vrot.slane %v389, 2
    %v391 = vmax.f32 %v389, %v390
    %v392 = vrot.slane %v391, 1
    %v393 = vmax.f32 %v391, %v392
    %v394 = vld [vmem:[#allocation6] sm:$0xff]
    %v395 = vld [vmem:[#allocation6 + $0x8] sm:$0xff]
    %v396 = vld [vmem:[#allocation6 + $0x10] sm:$0xff]
    %v397 = vld [vmem:[#allocation6 + $0x18] sm:$0xff]
    %v398 = vld [vmem:[%s6] sm:$0xff]
    %v399 = vld [vmem:[%s6 + $0x8] sm:$0xff]
    %v400 = vld [vmem:[%s6 + $0x10] sm:$0xff]
    %v401 = vld [vmem:[%s6 + $0x18] sm:$0xff]
    %403 = vset.pattern.permute.xlu0 0
    %404 = vperm.xlu0 %403, %v398
    %v405 = vpop.permute.xlu0 %404
    %408 = vset.pattern.permute.xlu0 0
    %409 = vperm.xlu0 %408, %v399
    %v410 = vpop.permute.xlu0 %409
    %413 = vset.pattern.permute.xlu0 0
    %414 = vperm.xlu0 %413, %v400
    %v415 = vpop.permute.xlu0 %414
    %418 = vset.pattern.permute.xlu0 0
    %419 = vperm.xlu0 %418, %v401
    %v420 = vpop.permute.xlu0 %419
    %vm424 = vcmask 1041409
    %v425 = vsel %vm424, %v393, %v384
    %v427 = vsel %vm278, %v394, 0
    %v430 = vsel %vm278, %v395, 0
    %v433 = vsel %vm278, %v396, 0
    %v436 = vsel %vm278, %v397, 0
    %v438 = vsel %vm278, %v425, 0
    %440 = vmatprep.subr.mxu0 0.0
    %441 = vmatpush1.xpose.msra.mxu0 0.0
    %442 = vmatprep.subr.mxu0 0.0
    %443 = vmatpush1.xpose.msra.mxu0 0.0
    %444 = vmatprep.subr.mxu0 0.0
    %445 = vmatpush1.xpose.msra.mxu0 0.0
    %446 = vmatprep.subr.mxu0 0.0
    %447 = vmatpush1.xpose.msra.mxu0 0.0
    %448 = vmatprep.subr.mxu0 0.0
    %449 = vmatpush1.xpose.msra.mxu0 0.0
    %450 = vmatprep.subr.mxu0 0.0
    %451 = vmatpush1.xpose.msra.mxu0 0.0
    %452 = vmatprep.subr.mxu0 0.0
    %453 = vmatpush1.xpose.msra.mxu0 0.0
    %454 = vmatprep.subr.mxu0 0.0
    %455 = vmatpush1.xpose.msra.mxu0 0.0
    %456 = vmatprep.subr.mxu0 0.0
    %457 = vmatpush1.xpose.msra.mxu0 0.0
    %458 = vmatprep.subr.mxu0 0.0
    %459 = vmatpush1.xpose.msra.mxu0 0.0
    %460 = vmatprep.subr.mxu0 0.0
    %461 = vmatpush1.xpose.msra.mxu0 0.0
    %462 = vmatprep.subr.mxu0 0.0
    %463 = vmatpush1.xpose.msra.mxu0 0.0
    %464 = vmatprep.subr.mxu0 0.0
    %465 = vmatpush1.xpose.msra.mxu0 0.0
    %466 = vmatprep.subr.mxu0 0.0
    %467 = vmatpush1.xpose.msra.mxu0 0.0
    %468 = vmatprep.subr.mxu0 0.0
    %469 = vmatpush1.xpose.msra.mxu0 0.0
    %470 = vmatprep.subr.mxu0 0.0
    %471 = vmatpush1.xpose.msra.mxu0 %v438
    %472 = vmatprep.subr.mxu0 0.0
    %473 = vmatpush2.xpose.msra.mxu0 0.0
    %474 = vmatprep.subr.mxu0 0.0
    %475 = vmatpush2.xpose.msra.mxu0 0.0
    %476 = vmatprep.subr.mxu0 0.0
    %477 = vmatpush2.xpose.msra.mxu0 0.0
    %478 = vmatprep.subr.mxu0 0.0
    %479 = vmatpush2.xpose.msra.mxu0 0.0
    %480 = vmatprep.subr.mxu0 0.0
    %481 = vmatpush2.xpose.msra.mxu0 0.0
    %482 = vmatprep.subr.mxu0 0.0
    %483 = vmatpush2.xpose.msra.mxu0 0.0
    %484 = vmatprep.subr.mxu0 0.0
    %485 = vmatpush2.xpose.msra.mxu0 0.0
    %486 = vmatprep.subr.mxu0 0.0
    %487 = vmatpush2.xpose.msra.mxu0 0.0
    %488 = vmatprep.subr.mxu0 0.0
    %489 = vmatpush2.xpose.msra.mxu0 0.0
    %490 = vmatprep.subr.mxu0 0.0
    %491 = vmatpush2.xpose.msra.mxu0 0.0
    %492 = vmatprep.subr.mxu0 0.0
    %493 = vmatpush2.xpose.msra.mxu0 0.0
    %494 = vmatprep.subr.mxu0 0.0
    %495 = vmatpush2.xpose.msra.mxu0 0.0
    %496 = vmatprep.subr.mxu0 0.0
    %497 = vmatpush2.xpose.msra.mxu0 0.0
    %498 = vmatprep.subr.mxu0 0.0
    %499 = vmatpush2.xpose.msra.mxu0 0.0
    %500 = vmatprep.subr.mxu0 0.0
    %501 = vmatpush2.xpose.msra.mxu0 0.0
    %502 = vmatprep.subr.mxu0 0.0
    %503 = vmatpush2.xpose.msra.mxu0 0.0
    %504 = vmatprep.mubr.f32.mxu0 0.0
    %505 = vmatmul.mubr.f32.gmra.mxu0 %v427
    %v506 = vpop.f32.mrf.mxu0
    %v507 = vadd.f32 %v405, %v506
    %v508 = vpop.f32.mrf.mxu0
    %509 = vmatprep.mubr.f32.mxu0 0.0
    %510 = vmatmul.mubr.f32.gmra.mxu0 %v430
    %v511 = vpop.f32.mrf.mxu0
    %v512 = vadd.f32 %v410, %v511
    %v513 = vpop.f32.mrf.mxu0
    %514 = vmatprep.mubr.f32.mxu0 0.0
    %515 = vmatmul.mubr.f32.gmra.mxu0 %v433
    %v516 = vpop.f32.mrf.mxu0
    %v517 = vadd.f32 %v415, %v516
    %v518 = vpop.f32.mrf.mxu0
    %519 = vmatprep.mubr.f32.mxu0 0.0
    %520 = vmatmul.mubr.f32.gmra.mxu0 %v436
    %v521 = vpop.f32.mrf.mxu0
    %v522 = vadd.f32 %v420, %v521
    %v523 = vpop.f32.mrf.mxu0
    %524 = vdwg.mxu0
    %v525 = vmax.f32 %v507, 0.0
    %v526 = vmax.f32 %v512, 0.0
    %v527 = vmax.f32 %v517, 0.0
    %v528 = vmax.f32 %v522, 0.0
    %v529 = vld [vmem:[%s4] sm:$0xff]
    %v530 = vld [vmem:[%s6] sm:$0xff]
    %532 = vset.pattern.permute.xlu0 1
    %533 = vperm.xlu0 %532, %v530
    %v534 = vpop.permute.xlu0 %533
    %v537 = vsel %vm278, %v529, 0
    %539 = vmatprep.subr.mxu0 0.0
    %540 = vmatpush1.msra.mxu0 0.0
    %541 = vmatprep.subr.mxu0 0.0
    %542 = vmatpush1.msra.mxu0 0.0
    %543 = vmatprep.subr.mxu0 0.0
    %544 = vmatpush1.msra.mxu0 0.0
    %545 = vmatprep.subr.mxu0 0.0
    %546 = vmatpush1.msra.mxu0 0.0
    %547 = vmatprep.subr.mxu0 0.0
    %548 = vmatpush1.msra.mxu0 0.0
    %549 = vmatprep.subr.mxu0 0.0
    %550 = vmatpush1.msra.mxu0 0.0
    %551 = vmatprep.subr.mxu0 0.0
    %552 = vmatpush1.msra.mxu0 0.0
    %553 = vmatprep.subr.mxu0 0.0
    %554 = vmatpush1.msra.mxu0 0.0
    %555 = vmatprep.subr.mxu0 0.0
    %556 = vmatpush1.msra.mxu0 0.0
    %557 = vmatprep.subr.mxu0 0.0
    %558 = vmatpush1.msra.mxu0 0.0
    %559 = vmatprep.subr.mxu0 0.0
    %560 = vmatpush1.msra.mxu0 0.0
    %561 = vmatprep.subr.mxu0 0.0
    %562 = vmatpush1.msra.mxu0 0.0
    %563 = vmatprep.subr.mxu0 0.0
    %564 = vmatpush1.msra.mxu0 %v528
    %565 = vmatprep.subr.mxu0 0.0
    %566 = vmatpush1.msra.mxu0 %v527
    %567 = vmatprep.subr.mxu0 0.0
    %568 = vmatpush1.msra.mxu0 %v526
    %569 = vmatprep.subr.mxu0 0.0
    %570 = vmatpush1.msra.mxu0 %v525
    %571 = vmatprep.subr.mxu0 0.0
    %572 = vmatpush2.msra.mxu0 0.0
    %573 = vmatprep.subr.mxu0 0.0
    %574 = vmatpush2.msra.mxu0 0.0
    %575 = vmatprep.subr.mxu0 0.0
    %576 = vmatpush2.msra.mxu0 0.0
    %577 = vmatprep.subr.mxu0 0.0
    %578 = vmatpush2.msra.mxu0 0.0
    %579 = vmatprep.subr.mxu0 0.0
    %580 = vmatpush2.msra.mxu0 0.0
    %581 = vmatprep.subr.mxu0 0.0
    %582 = vmatpush2.msra.mxu0 0.0
    %583 = vmatprep.subr.mxu0 0.0
    %584 = vmatpush2.msra.mxu0 0.0
    %585 = vmatprep.subr.mxu0 0.0
    %586 = vmatpush2.msra.mxu0 0.0
    %587 = vmatprep.subr.mxu0 0.0
    %588 = vmatpush2.msra.mxu0 0.0
    %589 = vmatprep.subr.mxu0 0.0
    %590 = vmatpush2.msra.mxu0 0.0
    %591 = vmatprep.subr.mxu0 0.0
    %592 = vmatpush2.msra.mxu0 0.0
    %593 = vmatprep.subr.mxu0 0.0
    %594 = vmatpush2.msra.mxu0 0.0
    %595 = vmatprep.subr.mxu0 0.0
    %596 = vmatpush2.msra.mxu0 0.0
    %597 = vmatprep.subr.mxu0 0.0
    %598 = vmatpush2.msra.mxu0 0.0
    %599 = vmatprep.subr.mxu0 0.0
    %600 = vmatpush2.msra.mxu0 0.0
    %601 = vmatprep.subr.mxu0 0.0
    %602 = vmatpush2.msra.mxu0 0.0
    %603 = vmatprep.mubr.f32.mxu0 0.0
    %604 = vmatmul.mubr.f32.gmra.mxu0 %v537
    %v605 = vpop.f32.mrf.mxu0
    %v606 = vadd.f32 %v534, %v605
    %v607 = vpop.f32.mrf.mxu0
    %608 = vdwg.mxu0
    %vm609 = vcmask 15360
    %610 = vst.msk [vmem:[%s7] sm:$0xff] %vm609, %v606
    // Predicated region
    $region46: #{tpu_custom_call.1} parent=1 // pred_check
      _
    $region47: #{tpu_custom_call.1} parent=1 // pred_check_branch
      %612 = sbr.rel (0) target = $region49
    $region48: #{tpu_custom_call.1} parent=1 // pred_region
      _
    $region49: #{tpu_custom_call.1} parent=1 // pred_fallthru
      _
    // Predicated region
    $region50: #{tpu_custom_call.1} parent=1 // pred_check
      _
    $region51: #{tpu_custom_call.1} parent=1 // pred_check_branch
      %614 = sbr.rel (0) target = $region53
    $region52: #{tpu_custom_call.1} parent=1 // pred_region
      _
    $region53: #{tpu_custom_call.1} parent=1 // pred_fallthru
      _
    %615 = vsyncpa [#allocation3], 1
    %616 = vsyncpa [#allocation5], 1
    %617 = vsyncpa [#allocation8], 1

</llo_original>
